<compile_context>
chip_gen: v7x
topology: tpu7x:2x2x1
jax: 0.10.0
libtpu: 0.0.40
codegen_flags: <defaults>
</compile_context>

<pallas_src>
import functools

import jax
import jax.numpy as jnp
from jax.experimental import pallas as pl
from jax.experimental.pallas import tpu as pltpu

LANE = 128
ROW_ALIGN = 16          # bf16 packs 16 rows per vreg sublane group
BATCH_TILE_MAX = 2048   # cap per-step tile rows (step-overhead vs. VMEM tradeoff)


def _round_up(x, m):
    return ((x + m - 1) // m) * m


def _cdiv(a, b):
    return -(-a // b)


# --------------------------------------------------------------------------- kernels


def _mlp_body(x_ref, w1_ref, b1_ref, w2_ref, b2_ref, w3_ref, b3_ref):
    """relu(x@W1+b1) -> relu(.@W2+b2) -> .@W3+b3, bf16 MXU with fp32 accumulation."""
    x = x_ref[...].astype(jnp.bfloat16)  # fp32 -> bf16 cast happens in-kernel
    h1 = jnp.dot(x, w1_ref[...], preferred_element_type=jnp.float32) + b1_ref[...]
    h1 = jnp.maximum(h1, 0.0).astype(jnp.bfloat16)
    h2 = jnp.dot(h1, w2_ref[...], preferred_element_type=jnp.float32) + b2_ref[...]
    h2 = jnp.maximum(h2, 0.0).astype(jnp.bfloat16)
    return jnp.dot(h2, w3_ref[...], preferred_element_type=jnp.float32) + b3_ref[...]


def dqn_kernel(x_ref, w1_ref, b1_ref, w2_ref, b2_ref, w3_ref, b3_ref, o_ref):
    q = _mlp_body(x_ref, w1_ref, b1_ref, w2_ref, b2_ref, w3_ref, b3_ref)
    o_ref[...] = q.astype(o_ref.dtype)  # bf16 writeback


def dqn_argmax_kernel(action_dim, x_ref, w1_ref, b1_ref, w2_ref, b2_ref, w3_ref,
                      b3_ref, a_ref):
    """Fused greedy-action selection: argmax over the real action lanes only."""
    q = _mlp_body(x_ref, w1_ref, b1_ref, w2_ref, b2_ref, w3_ref, b3_ref)  # (TB, Ap) f32
    lane = jax.lax.broadcasted_iota(jnp.int32, q.shape, 1)
    q = jnp.where(lane < action_dim, q, -jnp.inf)        # padded lanes can never win
    m = jnp.max(q, axis=-1, keepdims=True)
    idx = jnp.where(q == m, lane, q.shape[-1])           # first-max tie-break
    a_ref[...] = jnp.min(idx, axis=-1, keepdims=True).astype(jnp.int32)


# --------------------------------------------------------------------- params / call


def prepare_params(w1, b1, w2, b2, w3, b3):
    """One-time padding/casting of parameters (do NOT redo per forward call).

    Weights -> bf16, output dims lane-padded to 128; K=state_dim left unpadded.
    Biases  -> fp32 (1, padded) rows, added after the fp32 accumulation.
    """
    state_dim, hidden = w1.shape
    action_dim = w3.shape[1]
    Hp = _round_up(hidden, LANE)
    Ap = _round_up(action_dim, LANE)

    w1p = jnp.zeros((state_dim, Hp), jnp.bfloat16).at[:, :hidden].set(
        w1.astype(jnp.bfloat16))
    b1p = jnp.zeros((1, Hp), jnp.float32).at[:, :hidden].set(b1[None, :])
    w2p = jnp.zeros((Hp, Hp), jnp.bfloat16).at[:hidden, :hidden].set(
        w2.astype(jnp.bfloat16))
    b2p = jnp.zeros((1, Hp), jnp.float32).at[:, :hidden].set(b2[None, :])
    w3p = jnp.zeros((Hp, Ap), jnp.bfloat16).at[:hidden, :action_dim].set(
        w3.astype(jnp.bfloat16))
    b3p = jnp.zeros((1, Ap), jnp.float32).at[:, :action_dim].set(b3[None, :])
    return w1p, b1p, w2p, b2p, w3p, b3p


def _batch_tiling(B):
    """Pick (padded batch, tile rows).  Single tile for small batches; >=2 tiles
    (v7x TC balance) capped at BATCH_TILE_MAX rows (v5e/v6e step overhead)."""
    B16 = _round_up(B, ROW_ALIGN)
    if B16 <= 512:
        return B16, B16
    n_tiles = max(2, _cdiv(B16, BATCH_TILE_MAX))
    TB = _round_up(_cdiv(B16, n_tiles), ROW_ALIGN)
    return n_tiles * TB, TB


def _dqn_pallas_call(kernel_fn, x, w1p, b1p, w2p, b2p, w3p, b3p, out_dtype,
                     out_last_dim):
    B, state_dim = x.shape
    Hp = w1p.shape[1]
    Ap = w3p.shape[1]
    Bp, TB = _batch_tiling(B)
    if Bp != B:
        x = jnp.pad(x, ((0, Bp - B), (0, 0)))
    grid = (Bp // TB,)

    # Weights/biases: constant block index -> stay resident in VMEM across steps.
    def wspec(shape):
        return pl.BlockSpec(shape, lambda i: (0, 0))

    flops = 2 * Bp * (state_dim * Hp + Hp * Hp + Hp * Ap)
    bytes_accessed = (
        Bp * state_dim * 4                                   # x (fp32)
        + (w1p.size + w2p.size + w3p.size) * 2               # bf16 weights
        + (b1p.size + b2p.size + b3p.size) * 4               # fp32 biases
        + Bp * out_last_dim * jnp.dtype(out_dtype).itemsize  # output
    )

    return pl.pallas_call(
        kernel_fn,
        out_shape=jax.ShapeDtypeStruct((Bp, out_last_dim), out_dtype),
        grid_spec=pltpu.PrefetchScalarGridSpec(
            num_scalar_prefetch=0,
            grid=grid,
            in_specs=[
                # x: blocked over batch; K=state_dim kept at full (unpadded) extent.
                pl.BlockSpec((TB, state_dim), lambda i: (i, 0)),
                wspec((state_dim, Hp)),
                wspec((1, Hp)),
                wspec((Hp, Hp)),
                wspec((1, Hp)),
                wspec((Hp, Ap)),
                wspec((1, Ap)),
            ],
            out_specs=pl.BlockSpec((TB, out_last_dim), lambda i: (i, 0)),
        ),
        compiler_params=pltpu.CompilerParams(
            # Batch tiles are independent -> parallel (shards across v7x's 2 TCs).
            dimension_semantics=("parallel",),
        ),
        cost_estimate=pl.CostEstimate(
            flops=flops, transcendentals=0, bytes_accessed=bytes_accessed),
    )(x, w1p, b1p, w2p, b2p, w3p, b3p)


@functools.partial(jax.jit, static_argnames=("action_dim",))
def dqn_forward(x, w1p, b1p, w2p, b2p, w3p, b3p, *, action_dim):
    """x: (B, state_dim) fp32. Params pre-padded via prepare_params.
    Returns (B, action_dim) fp32 Q-values (matches the PyTorch forward)."""
    out = _dqn_pallas_call(dqn_kernel, x, w1p, b1p, w2p, b2p, w3p, b3p,
                           jnp.bfloat16, w3p.shape[1])
    # Tiny (B x action_dim) slice+cast; the heavy padded fp32 writeback is gone.
    return out[: x.shape[0], :action_dim].astype(jnp.float32)


@functools.partial(jax.jit, static_argnames=("action_dim",))
def dqn_select_action(x, w1p, b1p, w2p, b2p, w3p, b3p, *, action_dim):
    """Fused greedy policy: returns (B,) int32 argmax_a Q(x, a)."""
    kernel = functools.partial(dqn_argmax_kernel, action_dim)
    out = _dqn_pallas_call(kernel, x, w1p, b1p, w2p, b2p, w3p, b3p, jnp.int32, 1)
    return out[: x.shape[0], 0]


def init_params(key, state_dim, hidden, action_dim):
    """Deterministic init mimicking nn.Linear (uniform +/- 1/sqrt(fan_in)), fp32."""
    ks = jax.random.split(key, 6)

    def lin(kw, kb, fan_in, fan_out):
        bound = 1.0 / jnp.sqrt(jnp.float32(fan_in))
        w = jax.random.uniform(kw, (fan_in, fan_out), jnp.float32, -bound, bound)
        b = jax.random.uniform(kb, (fan_out,), jnp.float32, -bound, bound)
        return w, b

    w1, b1 = lin(ks[0], ks[1], state_dim, hidden)
    w2, b2 = lin(ks[2], ks[3], hidden, hidden)
    w3, b3 = lin(ks[4], ks[5], hidden, action_dim)
    return w1, b1, w2, b2, w3, b3


if __name__ == "__main__":
    # highway-fast-v0 Kinematics obs: 5 vehicles x 5 features -> state_dim=25;
    # DiscreteMetaAction -> action_dim=5.
    batch = 2
    state_dim = 25
    hidden = 128
    action_dim = 5

    key = jax.random.PRNGKey(0)
    k_x, k_p, k_x2 = jax.random.split(key, 3)
    w1, b1, w2, b2, w3, b3 = init_params(k_p, state_dim, hidden, action_dim)
    params = prepare_params(w1, b1, w2, b2, w3, b3)  # pad/cast ONCE

    def ref_forward(xx):
        # fp32 reference on bf16-rounded inputs/weights (matches kernel numerics,
        # except the kernel additionally rounds the final output to bf16).
        xr = xx.astype(jnp.bfloat16).astype(jnp.float32)
        w1r = w1.astype(jnp.bfloat16).astype(jnp.float32)
        w2r = w2.astype(jnp.bfloat16).astype(jnp.float32)
        w3r = w3.astype(jnp.bfloat16).astype(jnp.float32)
        h = jnp.maximum(xr @ w1r + b1, 0.0).astype(jnp.bfloat16).astype(jnp.float32)
        h = jnp.maximum(h @ w2r + b2, 0.0).astype(jnp.bfloat16).astype(jnp.float32)
        return h @ w3r + b3

    # Small (single-env action-selection style) batch.
    x = jax.random.normal(k_x, (batch, state_dim), jnp.float32)
    out = jax.block_until_ready(dqn_forward(x, *params, action_dim=action_dim))
    assert out.shape == (batch, action_dim)
    ref = ref_forward(x)
    assert jnp.allclose(out, ref, atol=2e-2, rtol=2e-2)

    act = jax.block_until_ready(dqn_select_action(x, *params, action_dim=action_dim))
    assert act.shape == (batch,)
    q_sel = jnp.take_along_axis(ref, act[:, None], axis=1)[:, 0]
    assert jnp.all(q_sel >= ref.max(axis=-1) - 2e-2)

    # Larger (replay-batch style) batch exercising the batch-tiled grid path.
    x_big = jax.random.normal(k_x2, (1024, state_dim), jnp.float32)
    out_big = jax.block_until_ready(dqn_forward(x_big, *params, action_dim=action_dim))
    assert out_big.shape == (1024, action_dim)
    ref_big = ref_forward(x_big)
    assert jnp.allclose(out_big, ref_big, atol=2e-2, rtol=2e-2)

    act_big = jax.block_until_ready(
        dqn_select_action(x_big, *params, action_dim=action_dim))
    assert act_big.shape == (1024,)
    q_sel_big = jnp.take_along_axis(ref_big, act_big[:, None], axis=1)[:, 0]
    assert jnp.all(q_sel_big >= ref_big.max(axis=-1) - 2e-2)

    print("KERNEL_OK")
</pallas_src>

<mosaic_0001>
module attributes {stable_mosaic.version = 11 : i64} {
  func.func @dqn_kernel(%arg0: i32, %arg1: memref<16x25xf32, #tpu.memory_space<vmem>>, %arg2: memref<25x128xbf16, #tpu.memory_space<vmem>>, %arg3: memref<1x128xf32, #tpu.memory_space<vmem>>, %arg4: memref<128x128xbf16, #tpu.memory_space<vmem>>, %arg5: memref<1x128xf32, #tpu.memory_space<vmem>>, %arg6: memref<128x128xbf16, #tpu.memory_space<vmem>>, %arg7: memref<1x128xf32, #tpu.memory_space<vmem>>, %arg8: memref<16x128xbf16, #tpu.memory_space<vmem>>) attributes {dimension_semantics = [#tpu.dimension_semantics<parallel>], iteration_bounds = array<i64: 1>, scalar_prefetch = 0 : i64, scratch_operands = 0 : i64, tpu.core_type = #tpu.core_type<tc>, window_params = [{transform_indices = @transform_0, window_bounds = array<i64: 16, 25>}, {pipeline_mode = #tpu.pipeline_mode<synchronous>, transform_indices = @transform_1, window_bounds = array<i64: 25, 128>}, {pipeline_mode = #tpu.pipeline_mode<synchronous>, transform_indices = @transform_2, window_bounds = array<i64: 1, 128>}, {pipeline_mode = #tpu.pipeline_mode<synchronous>, transform_indices = @transform_3, window_bounds = array<i64: 128, 128>}, {pipeline_mode = #tpu.pipeline_mode<synchronous>, transform_indices = @transform_4, window_bounds = array<i64: 1, 128>}, {pipeline_mode = #tpu.pipeline_mode<synchronous>, transform_indices = @transform_5, window_bounds = array<i64: 128, 128>}, {pipeline_mode = #tpu.pipeline_mode<synchronous>, transform_indices = @transform_6, window_bounds = array<i64: 1, 128>}, {transform_indices = @transform_7, window_bounds = array<i64: 16, 128>}]} {
    %c0 = arith.constant 0 : index
    %c0_0 = arith.constant 0 : index
    %0 = vector.load %arg1[%c0, %c0_0] : memref<16x25xf32, #tpu.memory_space<vmem>>, vector<16x25xf32>
    %1 = arith.truncf %0 : vector<16x25xf32> to vector<16x25xbf16>
    %c0_1 = arith.constant 0 : index
    %c0_2 = arith.constant 0 : index
    %2 = vector.load %arg2[%c0_1, %c0_2] : memref<25x128xbf16, #tpu.memory_space<vmem>>, vector<25x128xbf16>
    %cst = arith.constant dense<0.000000e+00> : vector<16x128xf32>
    %3 = tpu.matmul %1, %2, %cst {dimension_numbers = #tpu.dot_dimension_numbers<[1], [0], [0], [1], [0, 0, 1, 1], [], []>} : vector<16x25xbf16>, vector<25x128xbf16>, vector<16x128xf32> -> vector<16x128xf32>
    %c0_3 = arith.constant 0 : index
    %c0_4 = arith.constant 0 : index
    %4 = vector.load %arg3[%c0_3, %c0_4] : memref<1x128xf32, #tpu.memory_space<vmem>>, vector<1x128xf32>
    %5 = vector.broadcast %4 : vector<1x128xf32> to vector<16x128xf32>
    %6 = arith.addf %3, %5 : vector<16x128xf32>
    %cst_5 = arith.constant 0.000000e+00 : f32
    %7 = vector.broadcast %cst_5 : f32 to vector<16x128xf32>
    %8 = arith.maximumf %6, %7 : vector<16x128xf32>
    %9 = arith.truncf %8 : vector<16x128xf32> to vector<16x128xbf16>
    %c0_6 = arith.constant 0 : index
    %c0_7 = arith.constant 0 : index
    %10 = vector.load %arg4[%c0_6, %c0_7] : memref<128x128xbf16, #tpu.memory_space<vmem>>, vector<128x128xbf16>
    %cst_8 = arith.constant dense<0.000000e+00> : vector<16x128xf32>
    %11 = tpu.matmul %9, %10, %cst_8 {dimension_numbers = #tpu.dot_dimension_numbers<[1], [0], [0], [1], [0, 0, 1, 1], [], []>} : vector<16x128xbf16>, vector<128x128xbf16>, vector<16x128xf32> -> vector<16x128xf32>
    %c0_9 = arith.constant 0 : index
    %c0_10 = arith.constant 0 : index
    %12 = vector.load %arg5[%c0_9, %c0_10] : memref<1x128xf32, #tpu.memory_space<vmem>>, vector<1x128xf32>
    %13 = vector.broadcast %12 : vector<1x128xf32> to vector<16x128xf32>
    %14 = arith.addf %11, %13 : vector<16x128xf32>
    %cst_11 = arith.constant 0.000000e+00 : f32
    %15 = vector.broadcast %cst_11 : f32 to vector<16x128xf32>
    %16 = arith.maximumf %14, %15 : vector<16x128xf32>
    %17 = arith.truncf %16 : vector<16x128xf32> to vector<16x128xbf16>
    %c0_12 = arith.constant 0 : index
    %c0_13 = arith.constant 0 : index
    %18 = vector.load %arg6[%c0_12, %c0_13] : memref<128x128xbf16, #tpu.memory_space<vmem>>, vector<128x128xbf16>
    %cst_14 = arith.constant dense<0.000000e+00> : vector<16x128xf32>
    %19 = tpu.matmul %17, %18, %cst_14 {dimension_numbers = #tpu.dot_dimension_numbers<[1], [0], [0], [1], [0, 0, 1, 1], [], []>} : vector<16x128xbf16>, vector<128x128xbf16>, vector<16x128xf32> -> vector<16x128xf32>
    %c0_15 = arith.constant 0 : index
    %c0_16 = arith.constant 0 : index
    %20 = vector.load %arg7[%c0_15, %c0_16] : memref<1x128xf32, #tpu.memory_space<vmem>>, vector<1x128xf32>
    %21 = vector.broadcast %20 : vector<1x128xf32> to vector<16x128xf32>
    %22 = arith.addf %19, %21 : vector<16x128xf32>
    %23 = arith.truncf %22 : vector<16x128xf32> to vector<16x128xbf16>
    %c0_17 = arith.constant 0 : index
    %c0_18 = arith.constant 0 : index
    %24 = vector.load %arg8[%c0_17, %c0_18] : memref<16x128xbf16, #tpu.memory_space<vmem>>, vector<16x128xbf16>
    tpu.vector_store %arg8[%c0_17, %c0_18], %23 {strides = array<i32>} : memref<16x128xbf16, #tpu.memory_space<vmem>>, vector<16x128xbf16>,
    return
  }
  func.func @transform_0(%arg0: i32) -> (i32, i32) {
    %c0_i32 = arith.constant 0 : i32
    %c0_i32_0 = arith.constant 0 : i32
    return %arg0, %c0_i32 : i32, i32
  }
  func.func @transform_1(%arg0: i32) -> (i32, i32) {
    %c0_i32 = arith.constant 0 : i32
    %c0_i32_0 = arith.constant 0 : i32
    %c0_i32_1 = arith.constant 0 : i32
    return %c0_i32, %c0_i32_0 : i32, i32
  }
  func.func @transform_2(%arg0: i32) -> (i32, i32) {
    %c0_i32 = arith.constant 0 : i32
    %c0_i32_0 = arith.constant 0 : i32
    %c0_i32_1 = arith.constant 0 : i32
    return %c0_i32, %c0_i32_0 : i32, i32
  }
  func.func @transform_3(%arg0: i32) -> (i32, i32) {
    %c0_i32 = arith.constant 0 : i32
    %c0_i32_0 = arith.constant 0 : i32
    %c0_i32_1 = arith.constant 0 : i32
    return %c0_i32, %c0_i32_0 : i32, i32
  }
  func.func @transform_4(%arg0: i32) -> (i32, i32) {
    %c0_i32 = arith.constant 0 : i32
    %c0_i32_0 = arith.constant 0 : i32
    %c0_i32_1 = arith.constant 0 : i32
    return %c0_i32, %c0_i32_0 : i32, i32
  }
  func.func @transform_5(%arg0: i32) -> (i32, i32) {
    %c0_i32 = arith.constant 0 : i32
    %c0_i32_0 = arith.constant 0 : i32
    %c0_i32_1 = arith.constant 0 : i32
    return %c0_i32, %c0_i32_0 : i32, i32
  }
  func.func @transform_6(%arg0: i32) -> (i32, i32) {
    %c0_i32 = arith.constant 0 : i32
    %c0_i32_0 = arith.constant 0 : i32
    %c0_i32_1 = arith.constant 0 : i32
    return %c0_i32, %c0_i32_0 : i32, i32
  }
  func.func @transform_7(%arg0: i32) -> (i32, i32) {
    %c0_i32 = arith.constant 0 : i32
    %c0_i32_0 = arith.constant 0 : i32
    return %arg0, %c0_i32 : i32, i32
  }
}

</mosaic_0001>

<llo_original>
// kernel: dqn_forward.1
$region0: #{dqn_forward.1}
  #allocation0 [shape = 'u32[]', space=smem, size = 0x4, offset = 0x4, fixed_abs, tag = 'smem constant byte address 0x4 - core index']
  #allocation1 [shape = 'u32[144,128]{1,0:T(1,128)}', space=vmem, size = 0x12000, scoped, tag = 'internal scratch']
  %s0 = inlined_call_operand.vmem [shape: f32[16,25], index: 0, kind: input, shape index: {}]
  %s1 = inlined_call_operand.vmem [shape: bf16[25,128], index: 1, kind: input, shape index: {}]
  %s2 = inlined_call_operand.vmem [shape: f32[1,128], index: 2, kind: input, shape index: {}]
  %s3 = inlined_call_operand.hbm [shape: bf16[128,128], index: 3, kind: input, shape index: {}]
  %s4 = inlined_call_operand.vmem [shape: f32[1,128], index: 4, kind: input, shape index: {}]
  %s5 = inlined_call_operand.hbm [shape: bf16[128,128], index: 5, kind: input, shape index: {}]
  %s6 = inlined_call_operand.vmem [shape: f32[1,128], index: 6, kind: input, shape index: {}]
  %s7 = inlined_call_operand.vmem [shape: bf16[16,128], index: 7, kind: output, shape index: {}]
  %s8 = sld [smem:[#allocation0]]
  $region46: #{dqn_forward.1} parent=0
    _
  %s10 = ssub.s32 1, %s8
  %s11 = scalar_select 0, %s10, %s8
  $region1: #{dqn_forward.1} parent=0
    #allocation2 [shape = 'u8[32768]{0}', space=vmem, size = 0x8000, scoped, tag = 'input window, operand 3, single buffered']
    #allocation3 [shape = 's32[1]{0}', space=sflag, size = 0x4, scoped, tag = 'scoped memory for dqn_forward.1']
    #allocation4 [shape = 'u8[32768]{0}', space=vmem, size = 0x8000, scoped, tag = 'input window, operand 5, single buffered']
    #allocation5 [shape = 's32[1]{0}', space=sflag, size = 0x4, scoped, tag = 'scoped memory for dqn_forward.1']
    %12 = vsyncpa [#allocation3], 0
    %13 = vsyncpa [#allocation5], 0
    // Predicated region
    $region2: #{dqn_forward.1} parent=1 // pred_check
      _
    $region3: #{dqn_forward.1} parent=1 // pred_check_branch
      %15 = sbr.rel (0) target = $region5
    $region4: #{dqn_forward.1} parent=1 // pred_region
      _
    $region5: #{dqn_forward.1} parent=1 // pred_fallthru
      _
    // Predicated region
    $region6: #{dqn_forward.1} parent=1 // pred_check
      _
    $region7: #{dqn_forward.1} parent=1 // pred_check_branch
      %17 = sbr.rel (0) target = $region9
    $region8: #{dqn_forward.1} parent=1 // pred_region
      _
    $region9: #{dqn_forward.1} parent=1 // pred_fallthru
      _
    // Predicated region
    $region10: #{dqn_forward.1} parent=1 // pred_check
      _
    $region11: #{dqn_forward.1} parent=1 // pred_check_branch
      %19 = sbr.rel (0) target = $region13
    $region12: #{dqn_forward.1} parent=1 // pred_region
      _
    $region13: #{dqn_forward.1} parent=1 // pred_fallthru
      _
    // Predicated region
    $region14: #{dqn_forward.1} parent=1 // pred_check
      _
    $region15: #{dqn_forward.1} parent=1 // pred_check_branch
      %21 = sbr.rel (0) target = $region17
    $region16: #{dqn_forward.1} parent=1 // pred_region
      %s23 = ssub.s32 1024, 1024
      %24 = vsyncadd [#allocation3], %s23
      %s25 = sshll.u32 [#allocation2], 4
      %s26 = int_to_ptr.vmem [resolvable:$true] %s25
      %31 = dma.hbm_to_vmem [thread:$0]  %s3, 1024, %s26, [#allocation3], 64, 64, 4
    $region17: #{dqn_forward.1} parent=1 // pred_fallthru
      _
    // Predicated region
    $region18: #{dqn_forward.1} parent=1 // pred_check
      _
    $region19: #{dqn_forward.1} parent=1 // pred_check_branch
      %33 = sbr.rel (0) target = $region21
    $region20: #{dqn_forward.1} parent=1 // pred_region
      _
    $region21: #{dqn_forward.1} parent=1 // pred_fallthru
      _
    // Predicated region
    $region22: #{dqn_forward.1} parent=1 // pred_check
      _
    $region23: #{dqn_forward.1} parent=1 // pred_check_branch
      %35 = sbr.rel (0) target = $region25
    $region24: #{dqn_forward.1} parent=1 // pred_region
      %s37 = ssub.s32 1024, 1024
      %38 = vsyncadd [#allocation5], %s37
      %s39 = sshll.u32 [#allocation4], 4
      %s40 = int_to_ptr.vmem [resolvable:$true] %s39
      %45 = dma.hbm_to_vmem [thread:$0]  %s5, 1024, %s40, [#allocation5], 64, 64, 4
    $region25: #{dqn_forward.1} parent=1 // pred_fallthru
      _
    // Predicated region
    $region26: #{dqn_forward.1} parent=1 // pred_check
      _
    $region27: #{dqn_forward.1} parent=1 // pred_check_branch
      %47 = sbr.rel (0) target = $region29
    $region28: #{dqn_forward.1} parent=1 // pred_region
      _
    $region29: #{dqn_forward.1} parent=1 // pred_fallthru
      _
    // Predicated region
    $region30: #{dqn_forward.1} parent=1 // pred_check
      _
    $region31: #{dqn_forward.1} parent=1 // pred_check_branch
      %49 = sbr.rel (0) target = $region33
    $region32: #{dqn_forward.1} parent=1 // pred_region
      %50 = dma.done [#allocation3], 1024
    $region33: #{dqn_forward.1} parent=1 // pred_fallthru
      _
    // Predicated region
    $region34: #{dqn_forward.1} parent=1 // pred_check
      _
    $region35: #{dqn_forward.1} parent=1 // pred_check_branch
      %52 = sbr.rel (0) target = $region37
    $region36: #{dqn_forward.1} parent=1 // pred_region
      %53 = dma.done [#allocation5], 1024
    $region37: #{dqn_forward.1} parent=1 // pred_fallthru
      _
    %v55 = vld [vmem:[%s0] sm:$0xff]
    %v56 = vld [vmem:[%s0 + $0x8] sm:$0xff]
    %v57 = vpack.c.bf16 %v56, %v55
    %v58 = vld [vmem:[%s1] sm:$0xf]
    %v59 = vld [vmem:[%s1 + $0x4] sm:$0xf]
    %v60 = vld [vmem:[%s1 + $0x8] sm:$0xf]
    %v61 = vld [vmem:[%s1 + $0xc] sm:$0x1]
    %v62 = vld [vmem:[%s2] sm:$0x1]
    %v64 = vlaneseq
    %v65 = vshrl.u32 %v64, 7
    %v66 = vsub.s32 0, %v65
    %v67 = vrot.slane %v62, %v66
    %v73 = vunpack.c.l.b16 %v58
    %v74 = vunpack.c.l.b16 %v59
    %v75 = vunpack.c.l.b16 %v60
    %v76 = vunpack.c.l.b16 %v61
    %v77 = vpack.c.b16 %v74, %v73
    %v78 = vpack.c.b16 %v76, %v75
    %vm80 = vcmask 203776
    %v82 = vsel %vm80, %v57, 0
    %vm84 = vcmask 1043456
    %vm85 = vcmask 1044480
    %v86 = vsel %vm84, 4294967295, 65535
    %v87 = vsel %vm85, %v86, 0
    %v89 = vand.u32 %v78, %v87
    %91 = vmatprep.subr.bf16.mxu0 0
    %92 = vmatpush1.bf16.msra.mxu0 %v77
    %93 = vmatprep.subr.bf16.mxu0 0
    %94 = vmatpush1.bf16.msra.mxu0 %v89
    %95 = vmatprep.subr.bf16.mxu0 0
    %96 = vmatpush1.bf16.msra.mxu0 0
    %97 = vmatprep.subr.bf16.mxu0 0
    %98 = vmatpush1.bf16.msra.mxu0 0
    %99 = vmatprep.subr.bf16.mxu0 0
    %100 = vmatpush1.bf16.msra.mxu0 0
    %101 = vmatprep.subr.bf16.mxu0 0
    %102 = vmatpush1.bf16.msra.mxu0 0
    %103 = vmatprep.subr.bf16.mxu0 0
    %104 = vmatpush1.bf16.msra.mxu0 0
    %105 = vmatprep.subr.bf16.mxu0 0
    %106 = vmatpush1.bf16.msra.mxu0 0
    %107 = vmatprep.subr.bf16.mxu0 0
    %108 = vmatpush1.bf16.msra.mxu0 0
    %109 = vmatprep.subr.bf16.mxu0 0
    %110 = vmatpush1.bf16.msra.mxu0 0
    %111 = vmatprep.subr.bf16.mxu0 0
    %112 = vmatpush1.bf16.msra.mxu0 0
    %113 = vmatprep.subr.bf16.mxu0 0
    %114 = vmatpush1.bf16.msra.mxu0 0
    %115 = vmatprep.subr.bf16.mxu0 0
    %116 = vmatpush1.bf16.msra.mxu0 0
    %117 = vmatprep.subr.bf16.mxu0 0
    %118 = vmatpush1.bf16.msra.mxu0 0
    %119 = vmatprep.subr.bf16.mxu0 0
    %120 = vmatpush1.bf16.msra.mxu0 0
    %121 = vmatprep.subr.bf16.mxu0 0
    %122 = vmatpush1.bf16.msra.mxu0 0
    %123 = vmatprep.mubr.bf16.mxu0 0
    %124 = vmatmul.mubr.bf16.gmra.mrb[0].mxu0 %v82
    %v125 = vpop.f32.mrb[0].mxu0
    %v126 = vadd.f32 %v67, %v125
    %v127 = vpop.f32.mrb[0].mxu0
    %v128 = vpop.f32.mrb[0].mxu0
    %v129 = vadd.f32 %v67, %v128
    %v130 = vpop.f32.mrb[0].mxu0
    %131 = vdwg.mxu0
    %v132 = vmax.f32 %v126, 0.0
    %v133 = vmax.f32 %v129, 0.0
    %v134 = vpack.c.bf16 %v133, %v132
    %v135 = vld [vmem:[#allocation2] sm:$0xf]
    %v136 = vld [vmem:[#allocation2 + $0x4] sm:$0xf]
    %v137 = vld [vmem:[#allocation2 + $0x8] sm:$0xf]
    %v138 = vld [vmem:[#allocation2 + $0xc] sm:$0xf]
    %v139 = vld [vmem:[#allocation2 + $0x10] sm:$0xf]
    %v140 = vld [vmem:[#allocation2 + $0x14] sm:$0xf]
    %v141 = vld [vmem:[#allocation2 + $0x18] sm:$0xf]
    %v142 = vld [vmem:[#allocation2 + $0x1c] sm:$0xf]
    %v143 = vld [vmem:[#allocation2 + $0x20] sm:$0xf]
    %v144 = vld [vmem:[#allocation2 + $0x24] sm:$0xf]
    %v145 = vld [vmem:[#allocation2 + $0x28] sm:$0xf]
    %v146 = vld [vmem:[#allocation2 + $0x2c] sm:$0xf]
    %v147 = vld [vmem:[#allocation2 + $0x30] sm:$0xf]
    %v148 = vld [vmem:[#allocation2 + $0x34] sm:$0xf]
    %v149 = vld [vmem:[#allocation2 + $0x38] sm:$0xf]
    %v150 = vld [vmem:[#allocation2 + $0x3c] sm:$0xf]
    %v151 = vld [vmem:[%s4] sm:$0x1]
    %v153 = vlaneseq
    %v154 = vshrl.u32 %v153, 7
    %v155 = vsub.s32 0, %v154
    %v156 = vrot.slane %v151, %v155
    %v174 = vunpack.c.l.b16 %v135
    %v175 = vunpack.c.l.b16 %v136
    %v176 = vunpack.c.l.b16 %v137
    %v177 = vunpack.c.l.b16 %v138
    %v178 = vunpack.c.l.b16 %v139
    %v179 = vunpack.c.l.b16 %v140
    %v180 = vunpack.c.l.b16 %v141
    %v181 = vunpack.c.l.b16 %v142
    %v182 = vunpack.c.l.b16 %v143
    %v183 = vunpack.c.l.b16 %v144
    %v184 = vunpack.c.l.b16 %v145
    %v185 = vunpack.c.l.b16 %v146
    %v186 = vunpack.c.l.b16 %v147
    %v187 = vunpack.c.l.b16 %v148
    %v188 = vunpack.c.l.b16 %v149
    %v189 = vunpack.c.l.b16 %v150
    %v190 = vpack.c.b16 %v175, %v174
    %v191 = vpack.c.b16 %v177, %v176
    %v192 = vpack.c.b16 %v179, %v178
    %v193 = vpack.c.b16 %v181, %v180
    %v194 = vpack.c.b16 %v183, %v182
    %v195 = vpack.c.b16 %v185, %v184
    %v196 = vpack.c.b16 %v187, %v186
    %v197 = vpack.c.b16 %v189, %v188
    %206 = vmatprep.subr.bf16.mxu0 0
    %207 = vmatpush1.bf16.msra.mxu0 %v190
    %208 = vmatprep.subr.bf16.mxu0 0
    %209 = vmatpush1.bf16.msra.mxu0 %v191
    %210 = vmatprep.subr.bf16.mxu0 0
    %211 = vmatpush1.bf16.msra.mxu0 %v192
    %212 = vmatprep.subr.bf16.mxu0 0
    %213 = vmatpush1.bf16.msra.mxu0 %v193
    %214 = vmatprep.subr.bf16.mxu0 0
    %215 = vmatpush1.bf16.msra.mxu0 %v194
    %216 = vmatprep.subr.bf16.mxu0 0
    %217 = vmatpush1.bf16.msra.mxu0 %v195
    %218 = vmatprep.subr.bf16.mxu0 0
    %219 = vmatpush1.bf16.msra.mxu0 %v196
    %220 = vmatprep.subr.bf16.mxu0 0
    %221 = vmatpush1.bf16.msra.mxu0 %v197
    %222 = vmatprep.subr.bf16.mxu0 0
    %223 = vmatpush1.bf16.msra.mxu0 0
    %224 = vmatprep.subr.bf16.mxu0 0
    %225 = vmatpush1.bf16.msra.mxu0 0
    %226 = vmatprep.subr.bf16.mxu0 0
    %227 = vmatpush1.bf16.msra.mxu0 0
    %228 = vmatprep.subr.bf16.mxu0 0
    %229 = vmatpush1.bf16.msra.mxu0 0
    %230 = vmatprep.subr.bf16.mxu0 0
    %231 = vmatpush1.bf16.msra.mxu0 0
    %232 = vmatprep.subr.bf16.mxu0 0
    %233 = vmatpush1.bf16.msra.mxu0 0
    %234 = vmatprep.subr.bf16.mxu0 0
    %235 = vmatpush1.bf16.msra.mxu0 0
    %236 = vmatprep.subr.bf16.mxu0 0
    %237 = vmatpush1.bf16.msra.mxu0 0
    %238 = vmatprep.mubr.bf16.mxu0 0
    %239 = vmatmul.mubr.bf16.gmra.mrb[0].mxu0 %v134
    %v240 = vpop.f32.mrb[0].mxu0
    %v241 = vadd.f32 %v156, %v240
    %v242 = vpop.f32.mrb[0].mxu0
    %v243 = vpop.f32.mrb[0].mxu0
    %v244 = vadd.f32 %v156, %v243
    %v245 = vpop.f32.mrb[0].mxu0
    %246 = vdwg.mxu0
    %v247 = vmax.f32 %v241, 0.0
    %v248 = vmax.f32 %v244, 0.0
    %v249 = vpack.c.bf16 %v248, %v247
    %v250 = vld [vmem:[#allocation4] sm:$0xf]
    %v251 = vld [vmem:[#allocation4 + $0x4] sm:$0xf]
    %v252 = vld [vmem:[#allocation4 + $0x8] sm:$0xf]
    %v253 = vld [vmem:[#allocation4 + $0xc] sm:$0xf]
    %v254 = vld [vmem:[#allocation4 + $0x10] sm:$0xf]
    %v255 = vld [vmem:[#allocation4 + $0x14] sm:$0xf]
    %v256 = vld [vmem:[#allocation4 + $0x18] sm:$0xf]
    %v257 = vld [vmem:[#allocation4 + $0x1c] sm:$0xf]
    %v258 = vld [vmem:[#allocation4 + $0x20] sm:$0xf]
    %v259 = vld [vmem:[#allocation4 + $0x24] sm:$0xf]
    %v260 = vld [vmem:[#allocation4 + $0x28] sm:$0xf]
    %v261 = vld [vmem:[#allocation4 + $0x2c] sm:$0xf]
    %v262 = vld [vmem:[#allocation4 + $0x30] sm:$0xf]
    %v263 = vld [vmem:[#allocation4 + $0x34] sm:$0xf]
    %v264 = vld [vmem:[#allocation4 + $0x38] sm:$0xf]
    %v265 = vld [vmem:[#allocation4 + $0x3c] sm:$0xf]
    %v266 = vld [vmem:[%s6] sm:$0x1]
    %v268 = vlaneseq
    %v269 = vshrl.u32 %v268, 7
    %v270 = vsub.s32 0, %v269
    %v271 = vrot.slane %v266, %v270
    %v289 = vunpack.c.l.b16 %v250
    %v290 = vunpack.c.l.b16 %v251
    %v291 = vunpack.c.l.b16 %v252
    %v292 = vunpack.c.l.b16 %v253
    %v293 = vunpack.c.l.b16 %v254
    %v294 = vunpack.c.l.b16 %v255
    %v295 = vunpack.c.l.b16 %v256
    %v296 = vunpack.c.l.b16 %v257
    %v297 = vunpack.c.l.b16 %v258
    %v298 = vunpack.c.l.b16 %v259
    %v299 = vunpack.c.l.b16 %v260
    %v300 = vunpack.c.l.b16 %v261
    %v301 = vunpack.c.l.b16 %v262
    %v302 = vunpack.c.l.b16 %v263
    %v303 = vunpack.c.l.b16 %v264
    %v304 = vunpack.c.l.b16 %v265
    %v305 = vpack.c.b16 %v290, %v289
    %v306 = vpack.c.b16 %v292, %v291
    %v307 = vpack.c.b16 %v294, %v293
    %v308 = vpack.c.b16 %v296, %v295
    %v309 = vpack.c.b16 %v298, %v297
    %v310 = vpack.c.b16 %v300, %v299
    %v311 = vpack.c.b16 %v302, %v301
    %v312 = vpack.c.b16 %v304, %v303
    %321 = vmatprep.subr.bf16.mxu0 0
    %322 = vmatpush1.bf16.msra.mxu0 %v305
    %323 = vmatprep.subr.bf16.mxu0 0
    %324 = vmatpush1.bf16.msra.mxu0 %v306
    %325 = vmatprep.subr.bf16.mxu0 0
    %326 = vmatpush1.bf16.msra.mxu0 %v307
    %327 = vmatprep.subr.bf16.mxu0 0
    %328 = vmatpush1.bf16.msra.mxu0 %v308
    %329 = vmatprep.subr.bf16.mxu0 0
    %330 = vmatpush1.bf16.msra.mxu0 %v309
    %331 = vmatprep.subr.bf16.mxu0 0
    %332 = vmatpush1.bf16.msra.mxu0 %v310
    %333 = vmatprep.subr.bf16.mxu0 0
    %334 = vmatpush1.bf16.msra.mxu0 %v311
    %335 = vmatprep.subr.bf16.mxu0 0
    %336 = vmatpush1.bf16.msra.mxu0 %v312
    %337 = vmatprep.subr.bf16.mxu0 0
    %338 = vmatpush1.bf16.msra.mxu0 0
    %339 = vmatprep.subr.bf16.mxu0 0
    %340 = vmatpush1.bf16.msra.mxu0 0
    %341 = vmatprep.subr.bf16.mxu0 0
    %342 = vmatpush1.bf16.msra.mxu0 0
    %343 = vmatprep.subr.bf16.mxu0 0
    %344 = vmatpush1.bf16.msra.mxu0 0
    %345 = vmatprep.subr.bf16.mxu0 0
    %346 = vmatpush1.bf16.msra.mxu0 0
    %347 = vmatprep.subr.bf16.mxu0 0
    %348 = vmatpush1.bf16.msra.mxu0 0
    %349 = vmatprep.subr.bf16.mxu0 0
    %350 = vmatpush1.bf16.msra.mxu0 0
    %351 = vmatprep.subr.bf16.mxu0 0
    %352 = vmatpush1.bf16.msra.mxu0 0
    %353 = vmatprep.mubr.bf16.mxu0 0
    %354 = vmatmul.mubr.bf16.gmra.mrb[0].mxu0 %v249
    %v355 = vpop.f32.mrb[0].mxu0
    %v356 = vadd.f32 %v271, %v355
    %v357 = vpop.f32.mrb[0].mxu0
    %v358 = vpop.f32.mrb[0].mxu0
    %v359 = vadd.f32 %v271, %v358
    %v360 = vpop.f32.mrb[0].mxu0
    %361 = vdwg.mxu0
    %v362 = vpack.c.bf16 %v359, %v356
    %v364 = vunpack.c.l.b16 %v362
    %v365 = vunpack.c.h.b16 %v362
    %v366 = vpack.c.b16 %v364, %v364
    %v367 = vpack.c.b16 %v365, %v365
    %370 = vst [vmem:[%s7] sm:$0xf] %v366
    %371 = vst [vmem:[%s7 + $0x4] sm:$0xf] %v367
    // Predicated region
    $region38: #{dqn_forward.1} parent=1 // pred_check
      _
    $region39: #{dqn_forward.1} parent=1 // pred_check_branch
      %373 = sbr.rel (0) target = $region41
    $region40: #{dqn_forward.1} parent=1 // pred_region
      _
    $region41: #{dqn_forward.1} parent=1 // pred_fallthru
      _
    // Predicated region
    $region42: #{dqn_forward.1} parent=1 // pred_check
      _
    $region43: #{dqn_forward.1} parent=1 // pred_check_branch
      %375 = sbr.rel (0) target = $region45
    $region44: #{dqn_forward.1} parent=1 // pred_region
      _
    $region45: #{dqn_forward.1} parent=1 // pred_fallthru
      _
    %376 = vsyncpa [#allocation3], 1
    %377 = vsyncpa [#allocation5], 1

</llo_original>
